<compile_context>
chip_gen: v5e
topology: v5e:2x2
jax: 0.10.0
libtpu: 0.0.40
codegen_flags: <defaults>
</compile_context>

<pallas_src>
import jax
import jax.numpy as jnp
from jax.experimental import pallas as pl
from jax.experimental.pallas import tpu as pltpu


def _backproject_kernel(invk_ref, pix_ref, flow_ref, depth_ref, out_ref):
    # invk_ref:  (B*9,)      SMEM   flattened inv_K[:, :3, :3] (row-major)
    # pix_ref:   (2, HW)     VMEM   row 0 = x coords, row 1 = y coords
    # flow_ref:  (B, 2, HW)  VMEM
    # depth_ref: (B, 1, HW)  VMEM
    # out_ref:   (B, 4, HW)  VMEM
    B = out_ref.shape[0]
    px = pix_ref[0:1, :]                       # (1, HW)
    py = pix_ref[1:2, :]                       # (1, HW)

    for b in range(B):                         # B is small & static: unrolled
        ux = px + flow_ref[b, 0:1, :]          # updated x pixel coords
        uy = py + flow_ref[b, 1:2, :]          # updated y pixel coords
        d = depth_ref[b]                       # (1, HW)
        # cam[i] = d * (K[i,0]*ux + K[i,1]*uy + K[i,2]*1)   (third row of
        # updated coords is exactly 1: ones + zero-padded flow channel)
        for i in range(3):
            k0 = invk_ref[b * 9 + i * 3 + 0]
            k1 = invk_ref[b * 9 + i * 3 + 1]
            k2 = invk_ref[b * 9 + i * 3 + 2]
            out_ref[b, i:i + 1, :] = d * (k0 * ux + k1 * uy + k2)
        out_ref[b, 3:4, :] = jnp.ones_like(d)  # homogeneous ones row


def make_pix_coords(H, W):
    """Equivalent of the module's pix_coords buffer (without the batch repeat
    or ones row): (2, H*W) with row 0 = x (col index), row 1 = y (row index)."""
    xs = jnp.arange(W, dtype=jnp.float32)
    ys = jnp.arange(H, dtype=jnp.float32)
    xg, yg = jnp.meshgrid(xs, ys, indexing="xy")          # each (H, W)
    return jnp.stack([xg.reshape(-1), yg.reshape(-1)], 0)  # (2, H*W)


def backproject_depth_ps(depth, inv_K, flow, pix_coords):
    """Equivalent of BackprojectDepth_Ps.forward.

    depth:      (B, 1, H, W) float32
    inv_K:      (B, 4, 4)    float32 (only the top-left 3x3 block is used)
    flow:       (B, 2, H, W) float32
    pix_coords: (2, H*W)     float32 (from make_pix_coords)
    returns     (B, 4, H*W)  float32
    """
    B, _, H, W = depth.shape
    HW = H * W

    # Pure contiguous reshapes / tiny slices — no transposes, no extra HBM pass.
    flow_flat = flow.reshape(B, 2, HW).astype(jnp.float32)
    depth_flat = depth.reshape(B, 1, HW).astype(jnp.float32)
    invk_flat = inv_K[:, :3, :3].reshape(B * 9).astype(jnp.float32)
    pix = pix_coords.astype(jnp.float32)

    return pl.pallas_call(
        _backproject_kernel,
        out_shape=jax.ShapeDtypeStruct((B, 4, HW), jnp.float32),
        in_specs=[
            pl.BlockSpec(memory_space=pltpu.MemorySpace.SMEM),  # inv_K scalars
            pl.BlockSpec(memory_space=pltpu.MemorySpace.VMEM),  # pix_coords
            pl.BlockSpec(memory_space=pltpu.MemorySpace.VMEM),  # flow
            pl.BlockSpec(memory_space=pltpu.MemorySpace.VMEM),  # depth
        ],
        out_specs=pl.BlockSpec(memory_space=pltpu.MemorySpace.VMEM),
    )(invk_flat, pix, flow_flat, depth_flat)


def _reference_backproject(depth, inv_K, flow, pix_coords):
    """Pure-JAX transcription of the PyTorch forward, for verification."""
    B, _, H, W = depth.shape
    HW = H * W
    ones = jnp.ones((B, 1, HW), jnp.float32)
    flow_expanded = jnp.concatenate(
        [flow, jnp.zeros((B, 1, H, W), flow.dtype)], axis=1)
    flow_flat = flow_expanded.reshape(B, 3, HW)
    pix = jnp.concatenate(
        [jnp.broadcast_to(pix_coords[None], (B, 2, HW)), ones], axis=1)
    updated = pix + flow_flat
    cam = jnp.einsum("bij,bjp->bip", inv_K[:, :3, :3], updated)
    cam = depth.reshape(B, 1, HW) * cam
    return jnp.concatenate([cam, ones], axis=1)


if __name__ == "__main__":
    B, H, W = 2, 16, 16

    key = jax.random.PRNGKey(0)
    kd, kk, kf = jax.random.split(key, 3)

    depth = jax.random.uniform(kd, (B, 1, H, W),
                               minval=0.1, maxval=10.0, dtype=jnp.float32)
    inv_K = jax.random.normal(kk, (B, 4, 4), dtype=jnp.float32)
    flow = jax.random.normal(kf, (B, 2, H, W), dtype=jnp.float32)
    pix_coords = make_pix_coords(H, W)

    out = backproject_depth_ps(depth, inv_K, flow, pix_coords)
    out = jax.block_until_ready(out)

    ref = _reference_backproject(depth, inv_K, flow, pix_coords)
    assert out.shape == (B, 4, H * W)
    assert jnp.allclose(out, ref, atol=1e-4, rtol=1e-4), "mismatch vs reference"

    print("KERNEL_OK")
</pallas_src>

<mosaic_0001>
module attributes {stable_mosaic.version = 11 : i64} {
  func.func @_backproject_kernel(%arg0: memref<18xf32, #tpu.memory_space<smem>>, %arg1: memref<2x256xf32, #tpu.memory_space<vmem>>, %arg2: memref<2x2x256xf32, #tpu.memory_space<vmem>>, %arg3: memref<2x1x256xf32, #tpu.memory_space<vmem>>, %arg4: memref<2x4x256xf32, #tpu.memory_space<vmem>>) attributes {dimension_semantics = [], scalar_prefetch = 0 : i64, scratch_operands = 0 : i64, tpu.core_type = #tpu.core_type<tc>} {
    %c0 = arith.constant 0 : index
    %c0_0 = arith.constant 0 : index
    %0 = vector.load %arg1[%c0, %c0_0] : memref<2x256xf32, #tpu.memory_space<vmem>>, vector<1x256xf32>
    %c1 = arith.constant 1 : index
    %c0_1 = arith.constant 0 : index
    %1 = vector.load %arg1[%c1, %c0_1] : memref<2x256xf32, #tpu.memory_space<vmem>>, vector<1x256xf32>
    %c0_2 = arith.constant 0 : index
    %c0_3 = arith.constant 0 : index
    %c0_4 = arith.constant 0 : index
    %2 = vector.load %arg2[%c0_2, %c0_3, %c0_4] : memref<2x2x256xf32, #tpu.memory_space<vmem>>, vector<1x1x256xf32>
    %3 = vector.shape_cast %2 : vector<1x1x256xf32> to vector<1x256xf32>
    %4 = arith.addf %0, %3 : vector<1x256xf32>
    %c0_5 = arith.constant 0 : index
    %c1_6 = arith.constant 1 : index
    %c0_7 = arith.constant 0 : index
    %5 = vector.load %arg2[%c0_5, %c1_6, %c0_7] : memref<2x2x256xf32, #tpu.memory_space<vmem>>, vector<1x1x256xf32>
    %6 = vector.shape_cast %5 : vector<1x1x256xf32> to vector<1x256xf32>
    %7 = arith.addf %1, %6 : vector<1x256xf32>
    %c0_8 = arith.constant 0 : index
    %c0_9 = arith.constant 0 : index
    %c0_10 = arith.constant 0 : index
    %8 = vector.load %arg3[%c0_8, %c0_9, %c0_10] : memref<2x1x256xf32, #tpu.memory_space<vmem>>, vector<1x1x256xf32>
    %9 = vector.shape_cast %8 : vector<1x1x256xf32> to vector<1x256xf32>
    %c0_11 = arith.constant 0 : index
    %10 = memref.load %arg0[%c0_11] : memref<18xf32, #tpu.memory_space<smem>>
    %c1_12 = arith.constant 1 : index
    %11 = memref.load %arg0[%c1_12] : memref<18xf32, #tpu.memory_space<smem>>
    %c2 = arith.constant 2 : index
    %12 = memref.load %arg0[%c2] : memref<18xf32, #tpu.memory_space<smem>>
    %13 = vector.broadcast %10 : f32 to vector<1x256xf32>
    %14 = arith.mulf %13, %4 : vector<1x256xf32>
    %15 = vector.broadcast %11 : f32 to vector<1x256xf32>
    %16 = arith.mulf %15, %7 : vector<1x256xf32>
    %17 = arith.addf %14, %16 : vector<1x256xf32>
    %18 = vector.broadcast %12 : f32 to vector<1x256xf32>
    %19 = arith.addf %17, %18 : vector<1x256xf32>
    %20 = arith.mulf %9, %19 : vector<1x256xf32>
    %c0_13 = arith.constant 0 : index
    %c0_14 = arith.constant 0 : index
    %c0_15 = arith.constant 0 : index
    %21 = vector.load %arg4[%c0_13, %c0_14, %c0_15] : memref<2x4x256xf32, #tpu.memory_space<vmem>>, vector<1x1x256xf32>
    %22 = vector.shape_cast %21 : vector<1x1x256xf32> to vector<1x256xf32>
    %23 = vector.shape_cast %20 : vector<1x256xf32> to vector<1x1x256xf32>
    tpu.vector_store %arg4[%c0_13, %c0_14, %c0_15], %23 {strides = array<i32>} : memref<2x4x256xf32, #tpu.memory_space<vmem>>, vector<1x1x256xf32>,
    %c3 = arith.constant 3 : index
    %24 = memref.load %arg0[%c3] : memref<18xf32, #tpu.memory_space<smem>>
    %c4 = arith.constant 4 : index
    %25 = memref.load %arg0[%c4] : memref<18xf32, #tpu.memory_space<smem>>
    %c5 = arith.constant 5 : index
    %26 = memref.load %arg0[%c5] : memref<18xf32, #tpu.memory_space<smem>>
    %27 = vector.broadcast %24 : f32 to vector<1x256xf32>
    %28 = arith.mulf %27, %4 : vector<1x256xf32>
    %29 = vector.broadcast %25 : f32 to vector<1x256xf32>
    %30 = arith.mulf %29, %7 : vector<1x256xf32>
    %31 = arith.addf %28, %30 : vector<1x256xf32>
    %32 = vector.broadcast %26 : f32 to vector<1x256xf32>
    %33 = arith.addf %31, %32 : vector<1x256xf32>
    %34 = arith.mulf %9, %33 : vector<1x256xf32>
    %c0_16 = arith.constant 0 : index
    %c1_17 = arith.constant 1 : index
    %c0_18 = arith.constant 0 : index
    %35 = vector.load %arg4[%c0_16, %c1_17, %c0_18] : memref<2x4x256xf32, #tpu.memory_space<vmem>>, vector<1x1x256xf32>
    %36 = vector.shape_cast %35 : vector<1x1x256xf32> to vector<1x256xf32>
    %37 = vector.shape_cast %34 : vector<1x256xf32> to vector<1x1x256xf32>
    tpu.vector_store %arg4[%c0_16, %c1_17, %c0_18], %37 {strides = array<i32>} : memref<2x4x256xf32, #tpu.memory_space<vmem>>, vector<1x1x256xf32>,
    %c6 = arith.constant 6 : index
    %38 = memref.load %arg0[%c6] : memref<18xf32, #tpu.memory_space<smem>>
    %c7 = arith.constant 7 : index
    %39 = memref.load %arg0[%c7] : memref<18xf32, #tpu.memory_space<smem>>
    %c8 = arith.constant 8 : index
    %40 = memref.load %arg0[%c8] : memref<18xf32, #tpu.memory_space<smem>>
    %41 = vector.broadcast %38 : f32 to vector<1x256xf32>
    %42 = arith.mulf %41, %4 : vector<1x256xf32>
    %43 = vector.broadcast %39 : f32 to vector<1x256xf32>
    %44 = arith.mulf %43, %7 : vector<1x256xf32>
    %45 = arith.addf %42, %44 : vector<1x256xf32>
    %46 = vector.broadcast %40 : f32 to vector<1x256xf32>
    %47 = arith.addf %45, %46 : vector<1x256xf32>
    %48 = arith.mulf %9, %47 : vector<1x256xf32>
    %c0_19 = arith.constant 0 : index
    %c2_20 = arith.constant 2 : index
    %c0_21 = arith.constant 0 : index
    %49 = vector.load %arg4[%c0_19, %c2_20, %c0_21] : memref<2x4x256xf32, #tpu.memory_space<vmem>>, vector<1x1x256xf32>
    %50 = vector.shape_cast %49 : vector<1x1x256xf32> to vector<1x256xf32>
    %51 = vector.shape_cast %48 : vector<1x256xf32> to vector<1x1x256xf32>
    tpu.vector_store %arg4[%c0_19, %c2_20, %c0_21], %51 {strides = array<i32>} : memref<2x4x256xf32, #tpu.memory_space<vmem>>, vector<1x1x256xf32>,
    %cst = arith.constant 1.000000e+00 : f32
    %52 = vector.broadcast %cst : f32 to vector<1x256xf32>
    %c0_22 = arith.constant 0 : index
    %c3_23 = arith.constant 3 : index
    %c0_24 = arith.constant 0 : index
    %53 = vector.load %arg4[%c0_22, %c3_23, %c0_24] : memref<2x4x256xf32, #tpu.memory_space<vmem>>, vector<1x1x256xf32>
    %54 = vector.shape_cast %53 : vector<1x1x256xf32> to vector<1x256xf32>
    %55 = vector.shape_cast %52 : vector<1x256xf32> to vector<1x1x256xf32>
    tpu.vector_store %arg4[%c0_22, %c3_23, %c0_24], %55 {strides = array<i32>} : memref<2x4x256xf32, #tpu.memory_space<vmem>>, vector<1x1x256xf32>,
    %c1_25 = arith.constant 1 : index
    %c0_26 = arith.constant 0 : index
    %c0_27 = arith.constant 0 : index
    %56 = vector.load %arg2[%c1_25, %c0_26, %c0_27] : memref<2x2x256xf32, #tpu.memory_space<vmem>>, vector<1x1x256xf32>
    %57 = vector.shape_cast %56 : vector<1x1x256xf32> to vector<1x256xf32>
    %58 = arith.addf %0, %57 : vector<1x256xf32>
    %c1_28 = arith.constant 1 : index
    %c1_29 = arith.constant 1 : index
    %c0_30 = arith.constant 0 : index
    %59 = vector.load %arg2[%c1_28, %c1_29, %c0_30] : memref<2x2x256xf32, #tpu.memory_space<vmem>>, vector<1x1x256xf32>
    %60 = vector.shape_cast %59 : vector<1x1x256xf32> to vector<1x256xf32>
    %61 = arith.addf %1, %60 : vector<1x256xf32>
    %c1_31 = arith.constant 1 : index
    %c0_32 = arith.constant 0 : index
    %c0_33 = arith.constant 0 : index
    %62 = vector.load %arg3[%c1_31, %c0_32, %c0_33] : memref<2x1x256xf32, #tpu.memory_space<vmem>>, vector<1x1x256xf32>
    %63 = vector.shape_cast %62 : vector<1x1x256xf32> to vector<1x256xf32>
    %c9 = arith.constant 9 : index
    %64 = memref.load %arg0[%c9] : memref<18xf32, #tpu.memory_space<smem>>
    %c10 = arith.constant 10 : index
    %65 = memref.load %arg0[%c10] : memref<18xf32, #tpu.memory_space<smem>>
    %c11 = arith.constant 11 : index
    %66 = memref.load %arg0[%c11] : memref<18xf32, #tpu.memory_space<smem>>
    %67 = vector.broadcast %64 : f32 to vector<1x256xf32>
    %68 = arith.mulf %67, %58 : vector<1x256xf32>
    %69 = vector.broadcast %65 : f32 to vector<1x256xf32>
    %70 = arith.mulf %69, %61 : vector<1x256xf32>
    %71 = arith.addf %68, %70 : vector<1x256xf32>
    %72 = vector.broadcast %66 : f32 to vector<1x256xf32>
    %73 = arith.addf %71, %72 : vector<1x256xf32>
    %74 = arith.mulf %63, %73 : vector<1x256xf32>
    %c1_34 = arith.constant 1 : index
    %c0_35 = arith.constant 0 : index
    %c0_36 = arith.constant 0 : index
    %75 = vector.load %arg4[%c1_34, %c0_35, %c0_36] : memref<2x4x256xf32, #tpu.memory_space<vmem>>, vector<1x1x256xf32>
    %76 = vector.shape_cast %75 : vector<1x1x256xf32> to vector<1x256xf32>
    %77 = vector.shape_cast %74 : vector<1x256xf32> to vector<1x1x256xf32>
    tpu.vector_store %arg4[%c1_34, %c0_35, %c0_36], %77 {strides = array<i32>} : memref<2x4x256xf32, #tpu.memory_space<vmem>>, vector<1x1x256xf32>,
    %c12 = arith.constant 12 : index
    %78 = memref.load %arg0[%c12] : memref<18xf32, #tpu.memory_space<smem>>
    %c13 = arith.constant 13 : index
    %79 = memref.load %arg0[%c13] : memref<18xf32, #tpu.memory_space<smem>>
    %c14 = arith.constant 14 : index
    %80 = memref.load %arg0[%c14] : memref<18xf32, #tpu.memory_space<smem>>
    %81 = vector.broadcast %78 : f32 to vector<1x256xf32>
    %82 = arith.mulf %81, %58 : vector<1x256xf32>
    %83 = vector.broadcast %79 : f32 to vector<1x256xf32>
    %84 = arith.mulf %83, %61 : vector<1x256xf32>
    %85 = arith.addf %82, %84 : vector<1x256xf32>
    %86 = vector.broadcast %80 : f32 to vector<1x256xf32>
    %87 = arith.addf %85, %86 : vector<1x256xf32>
    %88 = arith.mulf %63, %87 : vector<1x256xf32>
    %c1_37 = arith.constant 1 : index
    %c1_38 = arith.constant 1 : index
    %c0_39 = arith.constant 0 : index
    %89 = vector.load %arg4[%c1_37, %c1_38, %c0_39] : memref<2x4x256xf32, #tpu.memory_space<vmem>>, vector<1x1x256xf32>
    %90 = vector.shape_cast %89 : vector<1x1x256xf32> to vector<1x256xf32>
    %91 = vector.shape_cast %88 : vector<1x256xf32> to vector<1x1x256xf32>
    tpu.vector_store %arg4[%c1_37, %c1_38, %c0_39], %91 {strides = array<i32>} : memref<2x4x256xf32, #tpu.memory_space<vmem>>, vector<1x1x256xf32>,
    %c15 = arith.constant 15 : index
    %92 = memref.load %arg0[%c15] : memref<18xf32, #tpu.memory_space<smem>>
    %c16 = arith.constant 16 : index
    %93 = memref.load %arg0[%c16] : memref<18xf32, #tpu.memory_space<smem>>
    %c17 = arith.constant 17 : index
    %94 = memref.load %arg0[%c17] : memref<18xf32, #tpu.memory_space<smem>>
    %95 = vector.broadcast %92 : f32 to vector<1x256xf32>
    %96 = arith.mulf %95, %58 : vector<1x256xf32>
    %97 = vector.broadcast %93 : f32 to vector<1x256xf32>
    %98 = arith.mulf %97, %61 : vector<1x256xf32>
    %99 = arith.addf %96, %98 : vector<1x256xf32>
    %100 = vector.broadcast %94 : f32 to vector<1x256xf32>
    %101 = arith.addf %99, %100 : vector<1x256xf32>
    %102 = arith.mulf %63, %101 : vector<1x256xf32>
    %c1_40 = arith.constant 1 : index
    %c2_41 = arith.constant 2 : index
    %c0_42 = arith.constant 0 : index
    %103 = vector.load %arg4[%c1_40, %c2_41, %c0_42] : memref<2x4x256xf32, #tpu.memory_space<vmem>>, vector<1x1x256xf32>
    %104 = vector.shape_cast %103 : vector<1x1x256xf32> to vector<1x256xf32>
    %105 = vector.shape_cast %102 : vector<1x256xf32> to vector<1x1x256xf32>
    tpu.vector_store %arg4[%c1_40, %c2_41, %c0_42], %105 {strides = array<i32>} : memref<2x4x256xf32, #tpu.memory_space<vmem>>, vector<1x1x256xf32>,
    %cst_43 = arith.constant 1.000000e+00 : f32
    %106 = vector.broadcast %cst_43 : f32 to vector<1x256xf32>
    %c1_44 = arith.constant 1 : index
    %c3_45 = arith.constant 3 : index
    %c0_46 = arith.constant 0 : index
    %107 = vector.load %arg4[%c1_44, %c3_45, %c0_46] : memref<2x4x256xf32, #tpu.memory_space<vmem>>, vector<1x1x256xf32>
    %108 = vector.shape_cast %107 : vector<1x1x256xf32> to vector<1x256xf32>
    %109 = vector.shape_cast %106 : vector<1x256xf32> to vector<1x1x256xf32>
    tpu.vector_store %arg4[%c1_44, %c3_45, %c0_46], %109 {strides = array<i32>} : memref<2x4x256xf32, #tpu.memory_space<vmem>>, vector<1x1x256xf32>,
    return
  }
}

</mosaic_0001>

<llo_original>
// kernel: tpu_custom_call.1
$region0: #{tpu_custom_call.1}
  #allocation0 [shape = 'u32[]', space=smem, size = 0x4, offset = 0x4, fixed_abs, tag = 'smem constant byte address 0x4 - core index']
  #allocation1 [shape = 'u32[72,128]{1,0:T(1,128)}', space=vmem, size = 0x9000, scoped, tag = 'internal scratch']
  %s0 = inlined_call_operand.hbm [shape: f32[18], index: 0, kind: input, shape index: {}]
  %s1 = inlined_call_operand.hbm [shape: f32[2,256], index: 1, kind: input, shape index: {}]
  %s2 = inlined_call_operand.hbm [shape: f32[2,2,256], index: 2, kind: input, shape index: {}]
  %s3 = inlined_call_operand.hbm [shape: f32[2,1,256], index: 3, kind: input, shape index: {}]
  %s4 = inlined_call_operand.hbm [shape: f32[2,4,256], index: 4, kind: output, shape index: {}]
  %s5 = sld [smem:[#allocation0]]
  $region42: #{tpu_custom_call.1} parent=0
    _
  %s7 = ssub.s32 1, %s5
  %s8 = scalar_select 0, %s7, %s5
  $region1: #{tpu_custom_call.1} parent=0
    #allocation2 [shape = 'u8[512]{0}', space=smem, size = 0x200, scoped, tag = 'input window, operand 0, single buffered']
    #allocation3 [shape = 's32[1]{0}', space=sflag, size = 0x4, scoped, tag = 'scoped memory for tpu_custom_call.1']
    #allocation4 [shape = 's32[1]{0}', space=sflag, size = 0x4, scoped, tag = 'scoped memory for tpu_custom_call.1']
    #allocation5 [shape = 's32[1]{0}', space=sflag, size = 0x4, scoped, tag = 'scoped memory for tpu_custom_call.1']
    #allocation6 [shape = 'u8[2048]{0}', space=vmem, size = 0x800, scoped, tag = 'input window, operand 1, single buffered']
    #allocation7 [shape = 'u8[4096]{0}', space=vmem, size = 0x1000, scoped, tag = 'input window, operand 2, single buffered']
    #allocation8 [shape = 's32[1]{0}', space=sflag, size = 0x4, scoped, tag = 'scoped memory for tpu_custom_call.1']
    #allocation9 [shape = 'u8[2048]{0}', space=vmem, size = 0x800, scoped, tag = 'input window, operand 3, single buffered']
    #allocation10 [shape = 'u8[8192]{0}', space=vmem, size = 0x2000, scoped, tag = 'output window, operand 0, single buffered']
    %9 = vsyncpa [#allocation5], 0
    %10 = vsyncpa [#allocation3], 0
    %11 = vsyncpa [#allocation8], 0
    %12 = vsyncpa [#allocation4], 0
    // Predicated region
    $region2: #{tpu_custom_call.1} parent=1 // pred_check
      _
    $region3: #{tpu_custom_call.1} parent=1 // pred_check_branch
      %14 = sbr.rel (0) target = $region5
    $region4: #{tpu_custom_call.1} parent=1 // pred_region
      %16 = vsyncadd [#allocation5], 0
      %s18 = sshll.u32 %s0, 4
      %s19 = int_to_ptr.hbm [resolvable:$true] %s18
      %21 = dma.hbm_to_smem %s19, 16, [#allocation2], [#allocation5]
    $region5: #{tpu_custom_call.1} parent=1 // pred_fallthru
      _
    // Predicated region
    $region6: #{tpu_custom_call.1} parent=1 // pred_check
      _
    $region7: #{tpu_custom_call.1} parent=1 // pred_check_branch
      %23 = sbr.rel (0) target = $region9
    $region8: #{tpu_custom_call.1} parent=1 // pred_region
      %25 = vsyncadd [#allocation3], 0
      %s27 = sshll.u32 %s1, 4
      %s28 = int_to_ptr.hbm [resolvable:$true] %s27
      %s29 = sshll.u32 [#allocation6], 4
      %s30 = int_to_ptr.vmem [resolvable:$true] %s29
      %32 = dma.hbm_to_vmem [thread:$0]  %s28, 64, %s30, [#allocation3]
    $region9: #{tpu_custom_call.1} parent=1 // pred_fallthru
      _
    // Predicated region
    $region10: #{tpu_custom_call.1} parent=1 // pred_check
      _
    $region11: #{tpu_custom_call.1} parent=1 // pred_check_branch
      %34 = sbr.rel (0) target = $region13
    $region12: #{tpu_custom_call.1} parent=1 // pred_region
      %36 = vsyncadd [#allocation8], 0
      %s37 = sshll.u32 %s2, 4
      %s38 = int_to_ptr.hbm [resolvable:$true] %s37
      %s39 = sshll.u32 [#allocation7], 4
      %s40 = int_to_ptr.vmem [resolvable:$true] %s39
      %45 = dma.hbm_to_vmem [thread:$0]  %s38, 128, %s40, [#allocation8], 64, 64, 4
    $region13: #{tpu_custom_call.1} parent=1 // pred_fallthru
      _
    // Predicated region
    $region14: #{tpu_custom_call.1} parent=1 // pred_check
      _
    $region15: #{tpu_custom_call.1} parent=1 // pred_check_branch
      %47 = sbr.rel (0) target = $region17
    $region16: #{tpu_custom_call.1} parent=1 // pred_region
      %49 = vsyncadd [#allocation8], 0
      %s50 = sshll.u32 %s3, 4
      %s51 = int_to_ptr.hbm [resolvable:$true] %s50
      %s52 = sshll.u32 [#allocation9], 4
      %s53 = int_to_ptr.vmem [resolvable:$true] %s52
      %58 = dma.hbm_to_vmem [thread:$0]  %s51, 64, %s53, [#allocation8], 32, 32, 2
    $region17: #{tpu_custom_call.1} parent=1 // pred_fallthru
      _
    // Predicated region
    $region18: #{tpu_custom_call.1} parent=1 // pred_check
      _
    $region19: #{tpu_custom_call.1} parent=1 // pred_check_branch
      %60 = sbr.rel (0) target = $region21
    $region20: #{tpu_custom_call.1} parent=1 // pred_region
      %62 = dma.done [#allocation5], 16
    $region21: #{tpu_custom_call.1} parent=1 // pred_fallthru
      _
    // Predicated region
    $region22: #{tpu_custom_call.1} parent=1 // pred_check
      _
    $region23: #{tpu_custom_call.1} parent=1 // pred_check_branch
      %64 = sbr.rel (0) target = $region25
    $region24: #{tpu_custom_call.1} parent=1 // pred_region
      %66 = dma.done [#allocation3], 64
    $region25: #{tpu_custom_call.1} parent=1 // pred_fallthru
      _
    // Predicated region
    $region26: #{tpu_custom_call.1} parent=1 // pred_check
      _
    $region27: #{tpu_custom_call.1} parent=1 // pred_check_branch
      %68 = sbr.rel (0) target = $region29
    $region28: #{tpu_custom_call.1} parent=1 // pred_region
      %70 = dma.done [#allocation8], 128
    $region29: #{tpu_custom_call.1} parent=1 // pred_fallthru
      _
    // Predicated region
    $region30: #{tpu_custom_call.1} parent=1 // pred_check
      _
    $region31: #{tpu_custom_call.1} parent=1 // pred_check_branch
      %72 = sbr.rel (0) target = $region33
    $region32: #{tpu_custom_call.1} parent=1 // pred_region
      %74 = dma.done [#allocation8], 64
    $region33: #{tpu_custom_call.1} parent=1 // pred_fallthru
      _
    %75 = sfence
    %v76 = vld [vmem:[#allocation6] ss:$2 sm:$0x3]
    %s77 = scalar_lea.vmem [#allocation6], 1
    %v78 = vld [vmem:[%s77] ss:$2 sm:$0x3]
    %v79 = vld [vmem:[#allocation7] ss:$2 sm:$0x3]
    %v80 = vadd.f32 %v76, %v79
    %s81 = scalar_lea.vmem [#allocation7], 1
    %v82 = vld [vmem:[%s81] ss:$2 sm:$0x3]
    %v83 = vadd.f32 %v78, %v82
    %v84 = vld [vmem:[#allocation9] sm:$0x3]
    %s85 = sld [smem:[#allocation2]]
    %s86 = sld [smem:[#allocation2 + $0x1]]
    %s87 = sld [smem:[#allocation2 + $0x2]]
    %v88 = vstv %s85
    %v89 = vmul.f32 %v88, %v80
    %v90 = vstv %s86
    %v91 = vmul.f32 %v90, %v83
    %v92 = vadd.f32 %v89, %v91
    %v93 = vstv %s87
    %v94 = vadd.f32 %v92, %v93
    %v95 = vmul.f32 %v84, %v94
    %v96 = vlaneseq
    %vm97 = vcmp.ge.s32.totalorder %v96, 0
    %vm98 = vcmp.lt.s32.totalorder %v96, 256
    %vm99 = vmand %vm97, %vm98
    %100 = vst.msk [vmem:[#allocation10] ss:$4 sm:$0x3] %vm99, %v95
    %s101 = sld [smem:[#allocation2 + $0x3]]
    %s102 = sld [smem:[#allocation2 + $0x4]]
    %s103 = sld [smem:[#allocation2 + $0x5]]
    %v104 = vstv %s101
    %v105 = vmul.f32 %v104, %v80
    %v106 = vstv %s102
    %v107 = vmul.f32 %v106, %v83
    %v108 = vadd.f32 %v105, %v107
    %v109 = vstv %s103
    %v110 = vadd.f32 %v108, %v109
    %v111 = vmul.f32 %v84, %v110
    %s112 = scalar_lea.vmem [#allocation10], 1
    %113 = vst.msk [vmem:[%s112] ss:$4 sm:$0x3] %vm99, %v111
    %s114 = sld [smem:[#allocation2 + $0x6]]
    %s115 = sld [smem:[#allocation2 + $0x7]]
    %s116 = sld [smem:[#allocation2 + $0x8]]
    %v117 = vstv %s114
    %v118 = vmul.f32 %v117, %v80
    %v119 = vstv %s115
    %v120 = vmul.f32 %v119, %v83
    %v121 = vadd.f32 %v118, %v120
    %v122 = vstv %s116
    %v123 = vadd.f32 %v121, %v122
    %v124 = vmul.f32 %v84, %v123
    %s125 = scalar_lea.vmem [#allocation10], 2
    %126 = vst.msk [vmem:[%s125] ss:$4 sm:$0x3] %vm99, %v124
    %s127 = scalar_lea.vmem [#allocation10], 3
    %128 = vst.msk [vmem:[%s127] ss:$4 sm:$0x3] %vm99, 1.0
    %s129 = scalar_lea.vmem [#allocation7], 4
    %v130 = vld [vmem:[%s129] ss:$2 sm:$0x3]
    %v131 = vadd.f32 %v76, %v130
    %s132 = scalar_lea.vmem %s129, 1 [#allocation7]
    %v133 = vld [vmem:[%s132] ss:$2 sm:$0x3]
    %v134 = vadd.f32 %v78, %v133
    %s135 = scalar_lea.vmem [#allocation9], 2
    %v136 = vld [vmem:[%s135] sm:$0x3]
    %s137 = sld [smem:[#allocation2 + $0x9]]
    %s138 = sld [smem:[#allocation2 + $0xa]]
    %s139 = sld [smem:[#allocation2 + $0xb]]
    %v140 = vstv %s137
    %v141 = vmul.f32 %v140, %v131
    %v142 = vstv %s138
    %v143 = vmul.f32 %v142, %v134
    %v144 = vadd.f32 %v141, %v143
    %v145 = vstv %s139
    %v146 = vadd.f32 %v144, %v145
    %v147 = vmul.f32 %v136, %v146
    %s148 = scalar_lea.vmem [#allocation10], 8
    %149 = vst.msk [vmem:[%s148] ss:$4 sm:$0x3] %vm99, %v147
    %s150 = sld [smem:[#allocation2 + $0xc]]
    %s151 = sld [smem:[#allocation2 + $0xd]]
    %s152 = sld [smem:[#allocation2 + $0xe]]
    %v153 = vstv %s150
    %v154 = vmul.f32 %v153, %v131
    %v155 = vstv %s151
    %v156 = vmul.f32 %v155, %v134
    %v157 = vadd.f32 %v154, %v156
    %v158 = vstv %s152
    %v159 = vadd.f32 %v157, %v158
    %v160 = vmul.f32 %v136, %v159
    %s161 = scalar_lea.vmem %s148, 1 [#allocation10]
    %162 = vst.msk [vmem:[%s161] ss:$4 sm:$0x3] %vm99, %v160
    %s163 = sld [smem:[#allocation2 + $0xf]]
    %s164 = sld [smem:[#allocation2 + $0x10]]
    %s165 = sld [smem:[#allocation2 + $0x11]]
    %v166 = vstv %s163
    %v167 = vmul.f32 %v166, %v131
    %v168 = vstv %s164
    %v169 = vmul.f32 %v168, %v134
    %v170 = vadd.f32 %v167, %v169
    %v171 = vstv %s165
    %v172 = vadd.f32 %v170, %v171
    %v173 = vmul.f32 %v136, %v172
    %s174 = scalar_lea.vmem %s148, 2 [#allocation10]
    %175 = vst.msk [vmem:[%s174] ss:$4 sm:$0x3] %vm99, %v173
    %s176 = scalar_lea.vmem %s148, 3 [#allocation10]
    %177 = vst.msk [vmem:[%s176] ss:$4 sm:$0x3] %vm99, 1.0
    // Predicated region
    $region34: #{tpu_custom_call.1} parent=1 // pred_check
      _
    $region35: #{tpu_custom_call.1} parent=1 // pred_check_branch
      %179 = sbr.rel (0) target = $region37
    $region36: #{tpu_custom_call.1} parent=1 // pred_region
      %181 = vsyncadd [#allocation4], 0
      %s182 = sshll.u32 [#allocation10], 4
      %s183 = int_to_ptr.vmem [resolvable:$true] %s182
      %s184 = sshll.u32 %s4, 4
      %s185 = int_to_ptr.hbm [resolvable:$true] %s184
      %190 = dma.vmem_to_hbm [thread:$0]  %s183, 256, %s185, [#allocation4], 128, 128, 8
    $region37: #{tpu_custom_call.1} parent=1 // pred_fallthru
      _
    // Predicated region
    $region38: #{tpu_custom_call.1} parent=1 // pred_check
      _
    $region39: #{tpu_custom_call.1} parent=1 // pred_check_branch
      %192 = sbr.rel (0) target = $region41
    $region40: #{tpu_custom_call.1} parent=1 // pred_region
      %194 = dma.done [#allocation4], 256
    $region41: #{tpu_custom_call.1} parent=1 // pred_fallthru
      _
    %195 = vsyncpa [#allocation3], 1
    %196 = vsyncpa [#allocation8], 1
    %197 = vsyncpa [#allocation4], 1
    %198 = vsyncpa [#allocation5], 1

</llo_original>
